<compile_context>
chip_gen: v7x
topology: tpu7x:2x2x1
jax: 0.10.0
libtpu: 0.0.40
codegen_flags: <defaults>
</compile_context>

<pallas_src>
import math

import jax
import jax.numpy as jnp
from jax import lax
from jax.experimental import pallas as pl
from jax.experimental.pallas import tpu as pltpu


def _round_up(x, m):
    return ((x + m - 1) // m) * m


# --------------------------- kernels ---------------------------------------
# x_ref: (tm, tk)   w_ref: (tk, tn)  [pre-masked, pre-transposed]
# o_ref: (tm, tn) f32 accumulator, resident across the innermost K axis.

def _linear_kernel_bias(x_ref, w_ref, b_ref, o_ref):
    k = pl.program_id(2)

    @pl.when(k == 0)
    def _():
        o_ref[...] = jnp.zeros_like(o_ref)

    o_ref[...] += jnp.dot(x_ref[...], w_ref[...],
                          preferred_element_type=jnp.float32)

    @pl.when(k == pl.num_programs(2) - 1)
    def _():
        o_ref[...] += b_ref[...]          # (1, tn) broadcast over tm


def _linear_kernel_nobias(x_ref, w_ref, o_ref):
    k = pl.program_id(2)

    @pl.when(k == 0)
    def _():
        o_ref[...] = jnp.zeros_like(o_ref)

    o_ref[...] += jnp.dot(x_ref[...], w_ref[...],
                          preferred_element_type=jnp.float32)


# --------------------------- wrapper ----------------------------------------

def make_customized_linear(weight, mask, bias=None, *,
                           tm=512, tn=512, tk=512,
                           compute_dtype=None,
                           min_macs_for_pallas=1 << 20,
                           vmem_limit_bytes=32 * 1024 * 1024):
    """Build fn(x) = x @ (weight * mask).T + bias as a Pallas TPU kernel.

    weight, mask: (OUT, IN); bias: (OUT,) or None; x: (B, IN).
    The masked / transposed / padded weight is prepared ONCE here (hoisted out
    of the per-call path).  `compute_dtype=jnp.bfloat16` optionally halves
    x/weight HBM bytes (f32 accumulation kept); default keeps exact f32.
    """
    OUT, IN = weight.shape
    assert mask.shape == (OUT, IN)
    acc_dtype = jnp.float32
    w_dtype = compute_dtype if compute_dtype is not None else weight.dtype

    # Pre-mask and pre-transpose once: kernel does a plain NN matmul.
    w_eff_t = (weight * mask).T.astype(w_dtype)            # (IN, OUT)

    # Batch-independent tile sizes / padded extents for the weight.
    tn_ = min(tn, _round_up(OUT, 128))
    tk_ = min(tk, _round_up(IN, 128))
    Np0 = _round_up(OUT, 128)
    # Guarantee >=2 blocks along the (parallel) N axis when possible so the
    # second TensorCore on v7x has work even for single-M-block batches.
    if tn_ >= Np0 and Np0 >= 256:
        tn_ = _round_up(-(-Np0 // 2), 128)
    Np = _round_up(OUT, tn_)
    Kp = _round_up(IN, tk_)

    if (Kp, Np) != (IN, OUT):
        w_p = jnp.pad(w_eff_t, ((0, Kp - IN), (0, Np - OUT)))
    else:
        w_p = w_eff_t

    has_bias = bias is not None
    if has_bias:
        b_f32 = bias.astype(acc_dtype)
        b_p = (jnp.pad(b_f32, (0, Np - OUT)) if Np != OUT else b_f32).reshape(1, Np)

    def apply(x, *, use_pallas=None):
        B, IN_x = x.shape
        assert IN_x == IN
        in_dtype = x.dtype

        if use_pallas is None:
            use_pallas = (B * IN * OUT) >= min_macs_for_pallas
        if not use_pallas:
            # Tiny layers: fixed pallas_call/pad/slice overhead dominates.
            out = jnp.dot(x.astype(w_dtype), w_eff_t,
                          preferred_element_type=acc_dtype)
            if has_bias:
                out = out + b_f32
            return out.astype(in_dtype)

        tm_ = min(tm, _round_up(B, 8))
        Mp = _round_up(B, tm_)

        x_c = x.astype(w_dtype)
        if (Mp, Kp) != (B, IN):
            x_p = jnp.pad(x_c, ((0, Mp - B), (0, Kp - IN)))
        else:
            x_p = x_c

        grid = (Mp // tm_, Np // tn_, Kp // tk_)

        in_specs = [
            pl.BlockSpec((tm_, tk_), lambda i, j, k: (i, k)),   # x
            pl.BlockSpec((tk_, tn_), lambda i, j, k: (k, j)),   # weight (masked, transposed)
        ]
        operands = [x_p, w_p]
        if has_bias:
            in_specs.append(pl.BlockSpec((1, tn_), lambda i, j, k: (0, j)))
            operands.append(b_p)
            kernel = _linear_kernel_bias
        else:
            kernel = _linear_kernel_nobias

        out_p = pl.pallas_call(
            kernel,
            out_shape=jax.ShapeDtypeStruct((Mp, Np), acc_dtype),
            grid_spec=pltpu.PrefetchScalarGridSpec(
                num_scalar_prefetch=0,
                grid=grid,
                in_specs=in_specs,
                out_specs=pl.BlockSpec((tm_, tn_), lambda i, j, k: (i, j)),
            ),
            compiler_params=pltpu.CompilerParams(
                dimension_semantics=("parallel", "parallel", "arbitrary"),
                vmem_limit_bytes=vmem_limit_bytes,
            ),
        )(*operands)

        return out_p[:B, :OUT].astype(in_dtype)

    return apply


def customized_linear(x, weight, mask, bias=None, **kwargs):
    """One-shot convenience wrapper (prefer make_customized_linear for reuse)."""
    return make_customized_linear(weight, mask, bias, **kwargs)(x)


# --------------------------- demo / self-test --------------------------------

if __name__ == "__main__":
    def build_layer(key, in_features, out_features):
        k_mask, k_w, k_b = jax.random.split(key, 3)
        # mask given to the module has shape (IN, OUT); module stores mask.T
        mask_in_out = (jax.random.uniform(k_mask, (in_features, out_features)) > 0.5
                       ).astype(jnp.float32)
        mask = mask_in_out.T                                     # (OUT, IN)
        stdv = 1.0 / math.sqrt(in_features)
        weight = jax.random.uniform(k_w, (out_features, in_features),
                                    minval=-stdv, maxval=stdv, dtype=jnp.float32)
        weight = weight * mask                                   # __init__ pre-mask
        b = jax.random.uniform(k_b, (out_features,),
                               minval=-stdv, maxval=stdv, dtype=jnp.float32)
        return weight, mask, b

    def reference(x, weight, mask, b):
        return jnp.dot(x, (weight * mask).T,
                       precision=lax.Precision.HIGHEST) + b[None, :]

    key = jax.random.PRNGKey(0)
    k1, k2, kx1, kx2 = jax.random.split(key, 4)

    # --- 1) tiny, module-spec-like shape: exercises padded Pallas path AND the
    #        small-problem jnp.dot fallback.
    IN1, OUT1, B1 = 32, 16, 8
    w1, m1, b1 = build_layer(k1, IN1, OUT1)
    x1 = jax.random.normal(kx1, (B1, IN1), dtype=jnp.float32)
    layer1 = make_customized_linear(w1, m1, b1)
    out1_pallas = jax.block_until_ready(layer1(x1, use_pallas=True))
    out1_fallbk = jax.block_until_ready(layer1(x1))            # auto -> jnp.dot
    ref1 = reference(x1, w1, m1, b1)
    assert out1_pallas.shape == (B1, OUT1)
    assert jnp.allclose(out1_pallas, ref1, atol=1e-5, rtol=1e-5)
    assert jnp.allclose(out1_fallbk, ref1, atol=1e-5, rtol=1e-5)

    # --- 2) larger (still small) shape that takes the Pallas path by default,
    #        with >1 block along N (megacore) and a multi-iteration grid.
    IN2, OUT2, B2 = 256, 384, 32
    w2, m2, b2 = build_layer(k2, IN2, OUT2)
    x2 = jax.random.normal(kx2, (B2, IN2), dtype=jnp.float32)
    layer2 = make_customized_linear(w2, m2, b2)
    out2 = jax.block_until_ready(layer2(x2, use_pallas=True))
    ref2 = reference(x2, w2, m2, b2)
    assert out2.shape == (B2, OUT2)
    assert jnp.allclose(out2, ref2, atol=1e-4, rtol=1e-4)

    print("KERNEL_OK")
</pallas_src>

<mosaic_0001>
module attributes {stable_mosaic.version = 11 : i64} {
  func.func @_linear_kernel_bias(%arg0: i32, %arg1: i32, %arg2: i32, %arg3: memref<8x128xf32, #tpu.memory_space<vmem>>, %arg4: memref<128x128xf32, #tpu.memory_space<vmem>>, %arg5: memref<1x128xf32, #tpu.memory_space<vmem>>, %arg6: memref<8x128xf32, #tpu.memory_space<vmem>>) attributes {dimension_semantics = [#tpu.dimension_semantics<parallel>, #tpu.dimension_semantics<parallel>, #tpu.dimension_semantics<arbitrary>], iteration_bounds = array<i64: 1, 1, 1>, scalar_prefetch = 0 : i64, scratch_operands = 0 : i64, tpu.core_type = #tpu.core_type<tc>, window_params = [{transform_indices = @transform_0, window_bounds = array<i64: 8, 128>}, {transform_indices = @transform_1, window_bounds = array<i64: 128, 128>}, {transform_indices = @transform_2, window_bounds = array<i64: 1, 128>}, {transform_indices = @transform_3, window_bounds = array<i64: 8, 128>}]} {
    %c0_i32 = arith.constant 0 : i32
    %0 = arith.cmpi eq, %arg2, %c0_i32 : i32
    %1 = arith.extui %0 : i1 to i32
    %c0_i32_0 = arith.constant 0 : i32
    %2 = arith.cmpi ne, %1, %c0_i32_0 : i32
    scf.if %2 {
      %cst_10 = arith.constant 0.000000e+00 : f32
      %12 = vector.broadcast %cst_10 : f32 to vector<8x128xf32>
      %c0_11 = arith.constant 0 : index
      %c0_12 = arith.constant 0 : index
      %13 = vector.load %arg6[%c0_11, %c0_12] : memref<8x128xf32, #tpu.memory_space<vmem>>, vector<8x128xf32>
      tpu.vector_store %arg6[%c0_11, %c0_12], %12 {strides = array<i32>} : memref<8x128xf32, #tpu.memory_space<vmem>>, vector<8x128xf32>,
    } else {
    }
    %c0 = arith.constant 0 : index
    %c0_1 = arith.constant 0 : index
    %3 = vector.load %arg6[%c0, %c0_1] : memref<8x128xf32, #tpu.memory_space<vmem>>, vector<8x128xf32>
    %c0_2 = arith.constant 0 : index
    %c0_3 = arith.constant 0 : index
    %4 = vector.load %arg3[%c0_2, %c0_3] : memref<8x128xf32, #tpu.memory_space<vmem>>, vector<8x128xf32>
    %c0_4 = arith.constant 0 : index
    %c0_5 = arith.constant 0 : index
    %5 = vector.load %arg4[%c0_4, %c0_5] : memref<128x128xf32, #tpu.memory_space<vmem>>, vector<128x128xf32>
    %cst = arith.constant dense<0.000000e+00> : vector<8x128xf32>
    %6 = tpu.matmul %4, %5, %cst {dimension_numbers = #tpu.dot_dimension_numbers<[1], [0], [0], [1], [0, 0, 1, 1], [], []>} : vector<8x128xf32>, vector<128x128xf32>, vector<8x128xf32> -> vector<8x128xf32>
    %7 = arith.addf %3, %6 : vector<8x128xf32>
    %c0_6 = arith.constant 0 : index
    %c0_7 = arith.constant 0 : index
    %8 = vector.load %arg6[%c0_6, %c0_7] : memref<8x128xf32, #tpu.memory_space<vmem>>, vector<8x128xf32>
    tpu.vector_store %arg6[%c0_6, %c0_7], %7 {strides = array<i32>} : memref<8x128xf32, #tpu.memory_space<vmem>>, vector<8x128xf32>,
    %c0_i32_8 = arith.constant 0 : i32
    %9 = arith.cmpi eq, %arg2, %c0_i32_8 : i32
    %10 = arith.extui %9 : i1 to i32
    %c0_i32_9 = arith.constant 0 : i32
    %11 = arith.cmpi ne, %10, %c0_i32_9 : i32
    scf.if %11 {
      %c0_10 = arith.constant 0 : index
      %c0_11 = arith.constant 0 : index
      %12 = vector.load %arg6[%c0_10, %c0_11] : memref<8x128xf32, #tpu.memory_space<vmem>>, vector<8x128xf32>
      %c0_12 = arith.constant 0 : index
      %c0_13 = arith.constant 0 : index
      %13 = vector.load %arg5[%c0_12, %c0_13] : memref<1x128xf32, #tpu.memory_space<vmem>>, vector<1x128xf32>
      %14 = vector.broadcast %13 : vector<1x128xf32> to vector<8x128xf32>
      %15 = arith.addf %12, %14 : vector<8x128xf32>
      %c0_14 = arith.constant 0 : index
      %c0_15 = arith.constant 0 : index
      %16 = vector.load %arg6[%c0_14, %c0_15] : memref<8x128xf32, #tpu.memory_space<vmem>>, vector<8x128xf32>
      tpu.vector_store %arg6[%c0_14, %c0_15], %15 {strides = array<i32>} : memref<8x128xf32, #tpu.memory_space<vmem>>, vector<8x128xf32>,
    } else {
    }
    return
  }
  func.func @transform_0(%arg0: i32, %arg1: i32, %arg2: i32) -> (i32, i32) {
    %c0_i32 = arith.constant 0 : i32
    return %arg0, %arg2 : i32, i32
  }
  func.func @transform_1(%arg0: i32, %arg1: i32, %arg2: i32) -> (i32, i32) {
    %c0_i32 = arith.constant 0 : i32
    return %arg2, %arg1 : i32, i32
  }
  func.func @transform_2(%arg0: i32, %arg1: i32, %arg2: i32) -> (i32, i32) {
    %c0_i32 = arith.constant 0 : i32
    %c0_i32_0 = arith.constant 0 : i32
    return %c0_i32, %arg1 : i32, i32
  }
  func.func @transform_3(%arg0: i32, %arg1: i32, %arg2: i32) -> (i32, i32) {
    %c0_i32 = arith.constant 0 : i32
    return %arg0, %arg1 : i32, i32
  }
}

</mosaic_0001>

<llo_original>
// kernel: tpu_custom_call.1
$region0: #{tpu_custom_call.1}
  #allocation0 [shape = 'u32[]', space=smem, size = 0x4, offset = 0x4, fixed_abs, tag = 'smem constant byte address 0x4 - core index']
  #allocation1 [shape = 'u32[144,128]{1,0:T(1,128)}', space=vmem, size = 0x12000, scoped, tag = 'internal scratch']
  %s0 = inlined_call_operand.hbm [shape: f32[8,128], index: 0, kind: input, shape index: {}]
  %s1 = inlined_call_operand.hbm [shape: f32[128,128], index: 1, kind: input, shape index: {}]
  %s2 = inlined_call_operand.vmem [shape: f32[1,128], index: 2, kind: input, shape index: {}]
  %s3 = inlined_call_operand.hbm [shape: f32[8,128], index: 3, kind: output, shape index: {}]
  %s4 = sld [smem:[#allocation0]]
  $region38: #{tpu_custom_call.1} parent=0
    _
  %s6 = ssub.s32 1, %s4
  %s7 = scalar_select 0, %s6, %s4
  $region1: #{tpu_custom_call.1} parent=0
    #allocation2 [shape = 'u8[4096]{0}', space=vmem, size = 0x1000, scoped, tag = 'input window, operand 0, single buffered']
    #allocation3 [shape = 's32[1]{0}', space=sflag, size = 0x4, scoped, tag = 'scoped memory for tpu_custom_call.1']
    #allocation4 [shape = 's32[1]{0}', space=sflag, size = 0x4, scoped, tag = 'scoped memory for tpu_custom_call.1']
    #allocation5 [shape = 'u8[65536]{0}', space=vmem, size = 0x10000, scoped, tag = 'input window, operand 1, single buffered']
    #allocation6 [shape = 's32[1]{0}', space=sflag, size = 0x4, scoped, tag = 'scoped memory for tpu_custom_call.1']
    #allocation7 [shape = 'u8[4096]{0}', space=vmem, size = 0x1000, scoped, tag = 'output window, operand 0, single buffered']
    %8 = vsyncpa [#allocation3], 0
    %9 = vsyncpa [#allocation6], 0
    %10 = vsyncpa [#allocation4], 0
    // Predicated region
    $region2: #{tpu_custom_call.1} parent=1 // pred_check
      _
    $region3: #{tpu_custom_call.1} parent=1 // pred_check_branch
      %12 = sbr.rel (0) target = $region5
    $region4: #{tpu_custom_call.1} parent=1 // pred_region
      %s14 = ssub.s32 128, 128
      %15 = vsyncadd [#allocation3], %s14
      %s17 = sshll.u32 [#allocation2], 4
      %s18 = int_to_ptr.vmem [resolvable:$true] %s17
      %20 = dma.hbm_to_vmem [thread:$0]  %s0, 128, %s18, [#allocation3]
    $region5: #{tpu_custom_call.1} parent=1 // pred_fallthru
      _
    // Predicated region
    $region6: #{tpu_custom_call.1} parent=1 // pred_check
      _
    $region7: #{tpu_custom_call.1} parent=1 // pred_check_branch
      %22 = sbr.rel (0) target = $region9
    $region8: #{tpu_custom_call.1} parent=1 // pred_region
      %s24 = ssub.s32 2048, 2048
      %25 = vsyncadd [#allocation6], %s24
      %s26 = sshll.u32 [#allocation5], 4
      %s27 = int_to_ptr.vmem [resolvable:$true] %s26
      %32 = dma.hbm_to_vmem [thread:$0]  %s1, 2048, %s27, [#allocation6], 128, 128, 8
    $region9: #{tpu_custom_call.1} parent=1 // pred_fallthru
      _
    // Predicated region
    $region10: #{tpu_custom_call.1} parent=1 // pred_check
      _
    $region11: #{tpu_custom_call.1} parent=1 // pred_check_branch
      %34 = sbr.rel (0) target = $region13
    $region12: #{tpu_custom_call.1} parent=1 // pred_region
      _
    $region13: #{tpu_custom_call.1} parent=1 // pred_fallthru
      _
    // Predicated region
    $region14: #{tpu_custom_call.1} parent=1 // pred_check
      _
    $region15: #{tpu_custom_call.1} parent=1 // pred_check_branch
      %36 = sbr.rel (0) target = $region17
    $region16: #{tpu_custom_call.1} parent=1 // pred_region
      %37 = dma.done [#allocation3], 128
    $region17: #{tpu_custom_call.1} parent=1 // pred_fallthru
      _
    // Predicated region
    $region18: #{tpu_custom_call.1} parent=1 // pred_check
      _
    $region19: #{tpu_custom_call.1} parent=1 // pred_check_branch
      %39 = sbr.rel (0) target = $region21
    $region20: #{tpu_custom_call.1} parent=1 // pred_region
      %40 = dma.done [#allocation6], 2048
    $region21: #{tpu_custom_call.1} parent=1 // pred_fallthru
      _
    %p41 = scmp.eq.s32.totalorder 0, 0
    // Predicated region
    $region22: #{tpu_custom_call.1} parent=1 // pred_check
      %p42 = pneg %p41
    $region23: #{tpu_custom_call.1} parent=1 // pred_check_branch
      %44 = sbr.rel (%p42) target = $region25
    $region24: #{tpu_custom_call.1} parent=1 // pred_region
      %45 = vst [vmem:[#allocation7] sm:$0xff] 0.0
    $region25: #{tpu_custom_call.1} parent=1 // pred_fallthru
      _
    %v46 = vld [vmem:[#allocation7] sm:$0xff]
    %v47 = vld [vmem:[#allocation2] sm:$0xff]
    %v48 = vld [vmem:[#allocation5] sm:$0xff]
    %v49 = vld [vmem:[#allocation5 + $0x8] sm:$0xff]
    %v50 = vld [vmem:[#allocation5 + $0x10] sm:$0xff]
    %v51 = vld [vmem:[#allocation5 + $0x18] sm:$0xff]
    %v52 = vld [vmem:[#allocation5 + $0x20] sm:$0xff]
    %v53 = vld [vmem:[#allocation5 + $0x28] sm:$0xff]
    %v54 = vld [vmem:[#allocation5 + $0x30] sm:$0xff]
    %v55 = vld [vmem:[#allocation5 + $0x38] sm:$0xff]
    %v56 = vld [vmem:[#allocation5 + $0x40] sm:$0xff]
    %v57 = vld [vmem:[#allocation5 + $0x48] sm:$0xff]
    %v58 = vld [vmem:[#allocation5 + $0x50] sm:$0xff]
    %v59 = vld [vmem:[#allocation5 + $0x58] sm:$0xff]
    %v60 = vld [vmem:[#allocation5 + $0x60] sm:$0xff]
    %v61 = vld [vmem:[#allocation5 + $0x68] sm:$0xff]
    %v62 = vld [vmem:[#allocation5 + $0x70] sm:$0xff]
    %v63 = vld [vmem:[#allocation5 + $0x78] sm:$0xff]
    %64 = vmatprep.subr.mxu0 0.0
    %65 = vmatpush1.msra.mxu0 %v48
    %66 = vmatprep.subr.mxu0 0.0
    %67 = vmatpush1.msra.mxu0 %v49
    %68 = vmatprep.subr.mxu0 0.0
    %69 = vmatpush1.msra.mxu0 %v50
    %70 = vmatprep.subr.mxu0 0.0
    %71 = vmatpush1.msra.mxu0 %v51
    %72 = vmatprep.subr.mxu0 0.0
    %73 = vmatpush1.msra.mxu0 %v52
    %74 = vmatprep.subr.mxu0 0.0
    %75 = vmatpush1.msra.mxu0 %v53
    %76 = vmatprep.subr.mxu0 0.0
    %77 = vmatpush1.msra.mxu0 %v54
    %78 = vmatprep.subr.mxu0 0.0
    %79 = vmatpush1.msra.mxu0 %v55
    %80 = vmatprep.subr.mxu0 0.0
    %81 = vmatpush1.msra.mxu0 %v56
    %82 = vmatprep.subr.mxu0 0.0
    %83 = vmatpush1.msra.mxu0 %v57
    %84 = vmatprep.subr.mxu0 0.0
    %85 = vmatpush1.msra.mxu0 %v58
    %86 = vmatprep.subr.mxu0 0.0
    %87 = vmatpush1.msra.mxu0 %v59
    %88 = vmatprep.subr.mxu0 0.0
    %89 = vmatpush1.msra.mxu0 %v60
    %90 = vmatprep.subr.mxu0 0.0
    %91 = vmatpush1.msra.mxu0 %v61
    %92 = vmatprep.subr.mxu0 0.0
    %93 = vmatpush1.msra.mxu0 %v62
    %94 = vmatprep.subr.mxu0 0.0
    %95 = vmatpush1.msra.mxu0 %v63
    %96 = vmatprep.subr.mxu0 0.0
    %97 = vmatpush1.msra.mxu0 0.0
    %98 = vmatprep.subr.mxu0 0.0
    %99 = vmatpush1.msra.mxu0 0.0
    %100 = vmatprep.subr.mxu0 0.0
    %101 = vmatpush1.msra.mxu0 0.0
    %102 = vmatprep.subr.mxu0 0.0
    %103 = vmatpush1.msra.mxu0 0.0
    %104 = vmatprep.subr.mxu0 0.0
    %105 = vmatpush1.msra.mxu0 0.0
    %106 = vmatprep.subr.mxu0 0.0
    %107 = vmatpush1.msra.mxu0 0.0
    %108 = vmatprep.subr.mxu0 0.0
    %109 = vmatpush1.msra.mxu0 0.0
    %110 = vmatprep.subr.mxu0 0.0
    %111 = vmatpush1.msra.mxu0 0.0
    %112 = vmatprep.subr.mxu0 0.0
    %113 = vmatpush1.msra.mxu0 0.0
    %114 = vmatprep.subr.mxu0 0.0
    %115 = vmatpush1.msra.mxu0 0.0
    %116 = vmatprep.subr.mxu0 0.0
    %117 = vmatpush1.msra.mxu0 0.0
    %118 = vmatprep.subr.mxu0 0.0
    %119 = vmatpush1.msra.mxu0 0.0
    %120 = vmatprep.subr.mxu0 0.0
    %121 = vmatpush1.msra.mxu0 0.0
    %122 = vmatprep.subr.mxu0 0.0
    %123 = vmatpush1.msra.mxu0 0.0
    %124 = vmatprep.subr.mxu0 0.0
    %125 = vmatpush1.msra.mxu0 0.0
    %126 = vmatprep.subr.mxu0 0.0
    %127 = vmatpush1.msra.mxu0 0.0
    %128 = vmatprep.mubr.f32.mxu0 0.0
    %129 = vmatmul.mubr.f32.gmra.mrb[0].mxu0 %v47
    %v130 = vpop.f32.mrb[0].mxu0
    %v131 = vadd.f32 0.0, %v130
    %v132 = vpop.f32.mrb[0].mxu0
    %133 = vdwg.mxu0
    %v134 = vadd.f32 %v46, %v131
    %135 = vst [vmem:[#allocation7] sm:$0xff] %v134
    // Predicated region
    $region26: #{tpu_custom_call.1} parent=1 // pred_check
      %p136 = pneg %p41
    $region27: #{tpu_custom_call.1} parent=1 // pred_check_branch
      %138 = sbr.rel (%p136) target = $region29
    $region28: #{tpu_custom_call.1} parent=1 // pred_region
      %v139 = vld [vmem:[#allocation7] sm:$0xff]
      %v140 = vld [vmem:[%s2] sm:$0x1]
      %v142 = vlaneseq
      %v143 = vshrl.u32 %v142, 7
      %v144 = vsub.s32 0, %v143
      %v145 = vrot.slane %v140, %v144
      %v147 = vadd.f32 %v139, %v145
      %148 = vst [vmem:[#allocation7] sm:$0xff] %v147
    $region29: #{tpu_custom_call.1} parent=1 // pred_fallthru
      _
    // Predicated region
    $region30: #{tpu_custom_call.1} parent=1 // pred_check
      _
    $region31: #{tpu_custom_call.1} parent=1 // pred_check_branch
      %150 = sbr.rel (0) target = $region33
    $region32: #{tpu_custom_call.1} parent=1 // pred_region
      %s152 = ssub.s32 128, 128
      %153 = vsyncadd [#allocation4], %s152
      %s155 = sshll.u32 [#allocation7], 4
      %s156 = int_to_ptr.vmem [resolvable:$true] %s155
      %158 = dma.vmem_to_hbm [thread:$0]  %s156, 128, %s3, [#allocation4]
    $region33: #{tpu_custom_call.1} parent=1 // pred_fallthru
      _
    // Predicated region
    $region34: #{tpu_custom_call.1} parent=1 // pred_check
      _
    $region35: #{tpu_custom_call.1} parent=1 // pred_check_branch
      %160 = sbr.rel (0) target = $region37
    $region36: #{tpu_custom_call.1} parent=1 // pred_region
      %161 = dma.done [#allocation4], 128
    $region37: #{tpu_custom_call.1} parent=1 // pred_fallthru
      _
    %162 = vsyncpa [#allocation3], 1
    %163 = vsyncpa [#allocation6], 1
    %164 = vsyncpa [#allocation4], 1

</llo_original>
